<compile_context>
chip_gen: v7x
topology: tpu7x:2x2x1
jax: 0.10.0
libtpu: 0.0.40
codegen_flags: <defaults>
</compile_context>

<pallas_src>
import functools

import jax
import jax.numpy as jnp
from jax import lax
from jax.experimental import pallas as pl
from jax.experimental.pallas import tpu as pltpu


def _round_up(v, m):
    return ((v + m - 1) // m) * m


def _cdiv(a, b):
    return -(-a // b)


# Double-buffered working-set budget: under v5e/v6e's 16/32 MiB scoped-VMEM
# defaults and well inside v7x's 64 MiB physical VMEM.
_VMEM_BUDGET_BYTES = 12 * 1024 * 1024

_FO_TILE_CANDIDATES = (512, 384, 256, 128)   # prefer >=256: v6e/v7x 256x256 MXU
_K_TILE_CANDIDATES = (1024, 896, 768, 640, 512, 384, 256, 128)


def _pick_aligned_tile(extent, candidates, max_extra_waste):
    """Largest 128-aligned tile whose padded extent stays within
    `max_extra_waste` of the minimal (128-aligned) padded extent."""
    base = _round_up(extent, 128)
    for cand in candidates:
        if _round_up(extent, cand) <= base * (1.0 + max_extra_waste):
            return cand, _round_up(extent, cand)
    return 128, base


def _plan_feature_tiles(f_out, f_in):
    tile_fo, fo_pad = _pick_aligned_tile(f_out, _FO_TILE_CANDIDATES, 0.25)
    tile_k, k_pad = _pick_aligned_tile(f_in, _K_TILE_CANDIDATES, 0.05)
    return tile_fo, fo_pad, tile_k, k_pad


def _vmem_bytes(tile_n, tile_fo, tile_k, in_bytes, w_buffers=2):
    x_bufs = 2 * tile_n * tile_k * in_bytes
    w_bufs = w_buffers * tile_fo * tile_k * in_bytes
    b_bufs = 2 * tile_fo * 4
    o_bufs = 2 * tile_n * tile_fo * 4
    return x_bufs + w_bufs + b_bufs + o_bufs


def _linear_kernel(x_ref, w_ref, b_ref, o_ref):
    """One (i, j, k) grid step of y = x @ W^T + b (output-stationary over k).

    x_ref: (tile_n,  tile_k)  batch x reduction tile of x        (compute dtype)
    w_ref: (tile_fo, tile_k)  out-feature x reduction tile of W  (PyTorch layout)
    b_ref: (1, tile_fo)       bias slice (f32)
    o_ref: (tile_n, tile_fo)  f32 output tile, VMEM-resident across the k axis
    """
    k = pl.program_id(2)

    @pl.when(k == 0)
    def _():
        # Initialize the resident output tile with the bias (added exactly once).
        o_ref[...] = jnp.broadcast_to(b_ref[...], o_ref.shape)

    # Contract x's F_in dim directly against W's F_in dim (x @ W^T): the MXU
    # consumes the PyTorch-layout (F_out, F_in) weight in place, no transposed
    # copy; bf16 inputs, f32 accumulation.
    # TODO(synk): on v5e, verify in the bundle dump that this rhs-contraction
    # emits no vxpose contending with vmatmul; if it does, pre-transpose W once
    # in prepare_linear_params instead.
    o_ref[...] += lax.dot_general(
        x_ref[...],
        w_ref[...],
        dimension_numbers=(((1,), (1,)), ((), ())),
        preferred_element_type=jnp.float32,
    )


def prepare_linear_params(weight, bias, *, compute_dtype=jnp.bfloat16):
    """Pad W/b to the kernel's tile grid and cast W to the MXU input dtype.

    Hoists the per-call jnp.pad + astype copy of the largest operand out of the
    hot path; the result can be reused across any number of forward calls.
    """
    f_out, f_in = weight.shape
    _, fo_pad, _, k_pad = _plan_feature_tiles(f_out, f_in)

    w = weight
    if (fo_pad, k_pad) != (f_out, f_in):
        w = jnp.pad(w, ((0, fo_pad - f_out), (0, k_pad - f_in)))
    w = w.astype(compute_dtype)

    b = bias.reshape(1, f_out).astype(jnp.float32)
    if fo_pad != f_out:
        b = jnp.pad(b, ((0, 0), (0, fo_pad - f_out)))
    return w, b


def _forward_prepared(x, w_prep, b_prep, *, f_out, f_in, compute_dtype):
    N, f_in_x = x.shape
    assert f_in_x == f_in, "weight/input feature mismatch"

    tile_fo, fo_pad, tile_k, k_pad = _plan_feature_tiles(f_out, f_in)
    assert w_prep.shape == (fo_pad, k_pad)
    in_bytes = jnp.dtype(compute_dtype).itemsize

    # ---- batch (M) tile: multiple of 16 (bf16 sublane packing) -------------
    cap = 1024 if N >= 8192 else 512
    if N <= cap:
        tile_n = _round_up(N, 16)
    else:
        tile_n = _round_up(_cdiv(N, _cdiv(N, cap)), 16)
    n_pad = _round_up(N, tile_n)

    # ---- megacore guard: avoid a (1, 1, K) grid on v7x's two TensorCores ---
    if n_pad // tile_n == 1 and fo_pad // tile_fo == 1 and tile_n >= 32:
        tile_n = _round_up(_cdiv(N, 2), 16)
        n_pad = _round_up(N, tile_n)

    # ---- deeper W pipelining for GEMV-like (DMA-latency-bound) calls -------
    deep_w = (N <= 256) and (k_pad // tile_k > 1)
    w_buffers = 3 if deep_w else 2

    # ---- keep the double-buffered working set inside the VMEM budget -------
    while (_vmem_bytes(tile_n, tile_fo, tile_k, in_bytes, w_buffers)
           > _VMEM_BUDGET_BYTES and tile_n > 16):
        tile_n = _round_up(tile_n // 2, 16)
        n_pad = _round_up(N, tile_n)

    # ---- x pad (no-op for aligned shapes) + MXU-dtype cast ------------------
    x_p = x
    if (n_pad, k_pad) != (N, f_in):
        x_p = jnp.pad(x_p, ((0, n_pad - N), (0, k_pad - f_in)))
    x_p = x_p.astype(compute_dtype)

    grid = (n_pad // tile_n, fo_pad // tile_fo, k_pad // tile_k)

    x_spec = pl.BlockSpec((tile_n, tile_k), lambda i, j, k: (i, k))
    if deep_w:
        w_spec = pl.BlockSpec((tile_fo, tile_k), lambda i, j, k: (j, k),
                              pipeline_mode=pl.Buffered(3))
    else:
        w_spec = pl.BlockSpec((tile_fo, tile_k), lambda i, j, k: (j, k))
    b_spec = pl.BlockSpec((1, tile_fo), lambda i, j, k: (0, j))
    o_spec = pl.BlockSpec((tile_n, tile_fo), lambda i, j, k: (i, j))

    out = pl.pallas_call(
        _linear_kernel,
        out_shape=jax.ShapeDtypeStruct((n_pad, fo_pad), jnp.float32),
        grid_spec=pltpu.PrefetchScalarGridSpec(
            num_scalar_prefetch=0,
            grid=grid,
            in_specs=[x_spec, w_spec, b_spec],
            out_specs=o_spec,
        ),
        compiler_params=pltpu.CompilerParams(
            dimension_semantics=("parallel", "parallel", "arbitrary"),
        ),
    )(x_p, w_prep, b_prep)

    if (n_pad, fo_pad) != (N, f_out):
        out = out[:N, :f_out]
    return out


def make_linear(weight, bias, *, compute_dtype=jnp.bfloat16, jit=True):
    """Reusable `forward(x)` with the weight pad + cast hoisted out of the call."""
    f_out, f_in = weight.shape
    w_prep, b_prep = prepare_linear_params(weight, bias, compute_dtype=compute_dtype)
    fn = functools.partial(_forward_prepared, w_prep=w_prep, b_prep=b_prep,
                           f_out=f_out, f_in=f_in, compute_dtype=compute_dtype)
    return jax.jit(fn) if jit else fn


def linear_forward(x, weight, bias, *, compute_dtype=jnp.bfloat16):
    """One-shot y = x @ weight.T + bias (PyTorch nn.Linear semantics)."""
    f_out, f_in = weight.shape
    w_prep, b_prep = prepare_linear_params(weight, bias, compute_dtype=compute_dtype)
    return _forward_prepared(x, w_prep, b_prep, f_out=f_out, f_in=f_in,
                             compute_dtype=compute_dtype)


# TODO(synk): MSELoss / RMSprop / fit() training loop are host-side
# orchestration (autograd + optimizer state), not forward ops — not kernels.


if __name__ == "__main__":
    key = jax.random.PRNGKey(0)

    # Shapes implied by the module: x:(N, F_in), y:(N, F_out), Linear(F_in, F_out).
    N, F_IN, F_OUT = 8, 32, 16
    kx, kw, kb, k2x, k2w, k2b = jax.random.split(key, 6)

    x = jax.random.normal(kx, (N, F_IN), dtype=jnp.float32)
    bound = 1.0 / (F_IN ** 0.5)        # PyTorch nn.Linear init range
    weight = jax.random.uniform(kw, (F_OUT, F_IN), jnp.float32, -bound, bound)
    bias = jax.random.uniform(kb, (F_OUT,), jnp.float32, -bound, bound)

    # Reusable forward: weight pad + bf16 cast done once, outside the hot path.
    linear = make_linear(weight, bias)
    y = jax.block_until_ready(linear(x))
    y_ref = x @ weight.T + bias
    assert y.shape == (N, F_OUT)
    assert jnp.allclose(y, y_ref, atol=3e-2, rtol=3e-2)

    # Exact-f32 path (bitwise-style parity with the PyTorch module's f32 math).
    y32 = jax.block_until_ready(
        linear_forward(x, weight, bias, compute_dtype=jnp.float32))
    assert jnp.allclose(y32, y_ref, atol=1e-5, rtol=1e-5)

    # Ragged shapes exercising F_out/F_in 128-padding (1100 -> 1152, not 1536),
    # the k-axis output-resident accumulator (3 k-steps), and the megacore
    # batch split: grid = (2, 1, 3).
    N2, F_IN2, F_OUT2 = 260, 1100, 300
    x2 = jax.random.normal(k2x, (N2, F_IN2), dtype=jnp.float32)
    bound2 = 1.0 / (F_IN2 ** 0.5)
    w2 = jax.random.uniform(k2w, (F_OUT2, F_IN2), jnp.float32, -bound2, bound2)
    b2 = jax.random.uniform(k2b, (F_OUT2,), jnp.float32, -bound2, bound2)

    y2 = jax.block_until_ready(linear_forward(x2, w2, b2))
    y2_ref = x2 @ w2.T + b2
    assert y2.shape == (N2, F_OUT2)
    assert jnp.allclose(y2, y2_ref, atol=5e-2, rtol=5e-2)

    print("KERNEL_OK")
</pallas_src>

<mosaic_0001>
module attributes {stable_mosaic.version = 11 : i64} {
  func.func @_linear_kernel(%arg0: i32, %arg1: i32, %arg2: i32, %arg3: memref<16x128xbf16, #tpu.memory_space<vmem>>, %arg4: memref<128x128xbf16, #tpu.memory_space<vmem>>, %arg5: memref<1x128xf32, #tpu.memory_space<vmem>>, %arg6: memref<16x128xf32, #tpu.memory_space<vmem>>) attributes {dimension_semantics = [#tpu.dimension_semantics<parallel>, #tpu.dimension_semantics<parallel>, #tpu.dimension_semantics<arbitrary>], iteration_bounds = array<i64: 1, 1, 1>, scalar_prefetch = 0 : i64, scratch_operands = 0 : i64, tpu.core_type = #tpu.core_type<tc>, window_params = [{transform_indices = @transform_0, window_bounds = array<i64: 16, 128>}, {transform_indices = @transform_1, window_bounds = array<i64: 128, 128>}, {transform_indices = @transform_2, window_bounds = array<i64: 1, 128>}, {transform_indices = @transform_3, window_bounds = array<i64: 16, 128>}]} {
    %c0_i32 = arith.constant 0 : i32
    %0 = arith.cmpi eq, %arg2, %c0_i32 : i32
    %1 = arith.extui %0 : i1 to i32
    %c0_i32_0 = arith.constant 0 : i32
    %2 = arith.cmpi ne, %1, %c0_i32_0 : i32
    scf.if %2 {
      %c0_8 = arith.constant 0 : index
      %c0_9 = arith.constant 0 : index
      %9 = vector.load %arg5[%c0_8, %c0_9] : memref<1x128xf32, #tpu.memory_space<vmem>>, vector<1x128xf32>
      %10 = vector.shape_cast %9 : vector<1x128xf32> to vector<1x128xf32>
      %11 = vector.broadcast %10 : vector<1x128xf32> to vector<16x128xf32>
      %c0_10 = arith.constant 0 : index
      %c0_11 = arith.constant 0 : index
      %12 = vector.load %arg6[%c0_10, %c0_11] : memref<16x128xf32, #tpu.memory_space<vmem>>, vector<16x128xf32>
      tpu.vector_store %arg6[%c0_10, %c0_11], %11 {strides = array<i32>} : memref<16x128xf32, #tpu.memory_space<vmem>>, vector<16x128xf32>,
    } else {
    }
    %c0 = arith.constant 0 : index
    %c0_1 = arith.constant 0 : index
    %3 = vector.load %arg6[%c0, %c0_1] : memref<16x128xf32, #tpu.memory_space<vmem>>, vector<16x128xf32>
    %c0_2 = arith.constant 0 : index
    %c0_3 = arith.constant 0 : index
    %4 = vector.load %arg3[%c0_2, %c0_3] : memref<16x128xbf16, #tpu.memory_space<vmem>>, vector<16x128xbf16>
    %c0_4 = arith.constant 0 : index
    %c0_5 = arith.constant 0 : index
    %5 = vector.load %arg4[%c0_4, %c0_5] : memref<128x128xbf16, #tpu.memory_space<vmem>>, vector<128x128xbf16>
    %cst = arith.constant dense<0.000000e+00> : vector<16x128xf32>
    %6 = tpu.matmul %4, %5, %cst {dimension_numbers = #tpu.dot_dimension_numbers<[1], [1], [0], [0], [0, 0, 1, 0], [], []>} : vector<16x128xbf16>, vector<128x128xbf16>, vector<16x128xf32> -> vector<16x128xf32>
    %7 = arith.addf %3, %6 : vector<16x128xf32>
    %c0_6 = arith.constant 0 : index
    %c0_7 = arith.constant 0 : index
    %8 = vector.load %arg6[%c0_6, %c0_7] : memref<16x128xf32, #tpu.memory_space<vmem>>, vector<16x128xf32>
    tpu.vector_store %arg6[%c0_6, %c0_7], %7 {strides = array<i32>} : memref<16x128xf32, #tpu.memory_space<vmem>>, vector<16x128xf32>,
    return
  }
  func.func @transform_0(%arg0: i32, %arg1: i32, %arg2: i32) -> (i32, i32) {
    %c0_i32 = arith.constant 0 : i32
    return %arg0, %arg2 : i32, i32
  }
  func.func @transform_1(%arg0: i32, %arg1: i32, %arg2: i32) -> (i32, i32) {
    %c0_i32 = arith.constant 0 : i32
    return %arg1, %arg2 : i32, i32
  }
  func.func @transform_2(%arg0: i32, %arg1: i32, %arg2: i32) -> (i32, i32) {
    %c0_i32 = arith.constant 0 : i32
    %c0_i32_0 = arith.constant 0 : i32
    return %c0_i32, %arg1 : i32, i32
  }
  func.func @transform_3(%arg0: i32, %arg1: i32, %arg2: i32) -> (i32, i32) {
    %c0_i32 = arith.constant 0 : i32
    return %arg0, %arg1 : i32, i32
  }
}

</mosaic_0001>

<llo_original>
// kernel: _forward_prepared.1
$region0: #{_forward_prepared.1}
  #allocation0 [shape = 'u32[]', space=smem, size = 0x4, offset = 0x4, fixed_abs, tag = 'smem constant byte address 0x4 - core index']
  #allocation1 [shape = 'u32[144,128]{1,0:T(1,128)}', space=vmem, size = 0x12000, scoped, tag = 'internal scratch']
  %s0 = inlined_call_operand.vmem [shape: bf16[16,128], index: 0, kind: input, shape index: {}]
  %s1 = inlined_call_operand.hbm [shape: bf16[128,128], index: 1, kind: input, shape index: {}]
  %s2 = inlined_call_operand.vmem [shape: f32[1,128], index: 2, kind: input, shape index: {}]
  %s3 = inlined_call_operand.vmem [shape: f32[16,128], index: 3, kind: output, shape index: {}]
  %s4 = sld [smem:[#allocation0]]
  $region30: #{_forward_prepared.1} parent=0
    _
  %s6 = ssub.s32 1, %s4
  %s7 = scalar_select 0, %s6, %s4
  $region1: #{_forward_prepared.1} parent=0
    #allocation2 [shape = 'u8[32768]{0}', space=vmem, size = 0x8000, scoped, tag = 'input window, operand 1, single buffered']
    #allocation3 [shape = 's32[1]{0}', space=sflag, size = 0x4, scoped, tag = 'scoped memory for _forward_prepared.1']
    %8 = vsyncpa [#allocation3], 0
    // Predicated region
    $region2: #{_forward_prepared.1} parent=1 // pred_check
      _
    $region3: #{_forward_prepared.1} parent=1 // pred_check_branch
      %10 = sbr.rel (0) target = $region5
    $region4: #{_forward_prepared.1} parent=1 // pred_region
      _
    $region5: #{_forward_prepared.1} parent=1 // pred_fallthru
      _
    // Predicated region
    $region6: #{_forward_prepared.1} parent=1 // pred_check
      _
    $region7: #{_forward_prepared.1} parent=1 // pred_check_branch
      %12 = sbr.rel (0) target = $region9
    $region8: #{_forward_prepared.1} parent=1 // pred_region
      %s14 = ssub.s32 1024, 1024
      %15 = vsyncadd [#allocation3], %s14
      %s16 = sshll.u32 [#allocation2], 4
      %s17 = int_to_ptr.vmem [resolvable:$true] %s16
      %22 = dma.hbm_to_vmem [thread:$0]  %s1, 1024, %s17, [#allocation3], 64, 64, 4
    $region9: #{_forward_prepared.1} parent=1 // pred_fallthru
      _
    // Predicated region
    $region10: #{_forward_prepared.1} parent=1 // pred_check
      _
    $region11: #{_forward_prepared.1} parent=1 // pred_check_branch
      %24 = sbr.rel (0) target = $region13
    $region12: #{_forward_prepared.1} parent=1 // pred_region
      _
    $region13: #{_forward_prepared.1} parent=1 // pred_fallthru
      _
    // Predicated region
    $region14: #{_forward_prepared.1} parent=1 // pred_check
      _
    $region15: #{_forward_prepared.1} parent=1 // pred_check_branch
      %26 = sbr.rel (0) target = $region17
    $region16: #{_forward_prepared.1} parent=1 // pred_region
      %27 = dma.done [#allocation3], 1024
    $region17: #{_forward_prepared.1} parent=1 // pred_fallthru
      _
    %p29 = scmp.eq.s32.totalorder 0, 0
    // Predicated region
    $region18: #{_forward_prepared.1} parent=1 // pred_check
      %p30 = pneg %p29
    $region19: #{_forward_prepared.1} parent=1 // pred_check_branch
      %32 = sbr.rel (%p30) target = $region21
    $region20: #{_forward_prepared.1} parent=1 // pred_region
      %v33 = vld [vmem:[%s2] sm:$0x1]
      %v35 = vlaneseq
      %v36 = vshrl.u32 %v35, 7
      %v37 = vsub.s32 0, %v36
      %v38 = vrot.slane %v33, %v37
      %40 = vst [vmem:[%s3] sm:$0xff] %v38
      %41 = vst [vmem:[%s3 + $0x8] sm:$0xff] %v38
    $region21: #{_forward_prepared.1} parent=1 // pred_fallthru
      _
    %v42 = vld [vmem:[%s3] sm:$0xff]
    %v43 = vld [vmem:[%s3 + $0x8] sm:$0xff]
    %v44 = vld [vmem:[%s0] sm:$0xf]
    %v45 = vld [vmem:[%s0 + $0x4] sm:$0xf]
    %v46 = vld [vmem:[#allocation2] sm:$0xf]
    %v47 = vld [vmem:[#allocation2 + $0x4] sm:$0xf]
    %v48 = vld [vmem:[#allocation2 + $0x8] sm:$0xf]
    %v49 = vld [vmem:[#allocation2 + $0xc] sm:$0xf]
    %v50 = vld [vmem:[#allocation2 + $0x10] sm:$0xf]
    %v51 = vld [vmem:[#allocation2 + $0x14] sm:$0xf]
    %v52 = vld [vmem:[#allocation2 + $0x18] sm:$0xf]
    %v53 = vld [vmem:[#allocation2 + $0x1c] sm:$0xf]
    %v54 = vld [vmem:[#allocation2 + $0x20] sm:$0xf]
    %v55 = vld [vmem:[#allocation2 + $0x24] sm:$0xf]
    %v56 = vld [vmem:[#allocation2 + $0x28] sm:$0xf]
    %v57 = vld [vmem:[#allocation2 + $0x2c] sm:$0xf]
    %v58 = vld [vmem:[#allocation2 + $0x30] sm:$0xf]
    %v59 = vld [vmem:[#allocation2 + $0x34] sm:$0xf]
    %v60 = vld [vmem:[#allocation2 + $0x38] sm:$0xf]
    %v61 = vld [vmem:[#allocation2 + $0x3c] sm:$0xf]
    %v64 = vunpack.c.l.b16 %v44
    %v65 = vunpack.c.l.b16 %v45
    %v66 = vpack.c.b16 %v65, %v64
    %v84 = vunpack.c.l.b16 %v46
    %v85 = vunpack.c.l.b16 %v47
    %v86 = vunpack.c.l.b16 %v48
    %v87 = vunpack.c.l.b16 %v49
    %v88 = vunpack.c.l.b16 %v50
    %v89 = vunpack.c.l.b16 %v51
    %v90 = vunpack.c.l.b16 %v52
    %v91 = vunpack.c.l.b16 %v53
    %v92 = vunpack.c.l.b16 %v54
    %v93 = vunpack.c.l.b16 %v55
    %v94 = vunpack.c.l.b16 %v56
    %v95 = vunpack.c.l.b16 %v57
    %v96 = vunpack.c.l.b16 %v58
    %v97 = vunpack.c.l.b16 %v59
    %v98 = vunpack.c.l.b16 %v60
    %v99 = vunpack.c.l.b16 %v61
    %v100 = vpack.c.b16 %v85, %v84
    %v101 = vpack.c.b16 %v87, %v86
    %v102 = vpack.c.b16 %v89, %v88
    %v103 = vpack.c.b16 %v91, %v90
    %v104 = vpack.c.b16 %v93, %v92
    %v105 = vpack.c.b16 %v95, %v94
    %v106 = vpack.c.b16 %v97, %v96
    %v107 = vpack.c.b16 %v99, %v98
    %116 = vmatprep.subr.bf16.mxu0 0
    %117 = vmatpush1.bf16.xpose.msra.mxu0 %v100
    %118 = vmatprep.subr.bf16.mxu0 0
    %119 = vmatpush1.bf16.xpose.msra.mxu0 %v101
    %120 = vmatprep.subr.bf16.mxu0 0
    %121 = vmatpush1.bf16.xpose.msra.mxu0 %v102
    %122 = vmatprep.subr.bf16.mxu0 0
    %123 = vmatpush1.bf16.xpose.msra.mxu0 %v103
    %124 = vmatprep.subr.bf16.mxu0 0
    %125 = vmatpush1.bf16.xpose.msra.mxu0 %v104
    %126 = vmatprep.subr.bf16.mxu0 0
    %127 = vmatpush1.bf16.xpose.msra.mxu0 %v105
    %128 = vmatprep.subr.bf16.mxu0 0
    %129 = vmatpush1.bf16.xpose.msra.mxu0 %v106
    %130 = vmatprep.subr.bf16.mxu0 0
    %131 = vmatpush1.bf16.xpose.msra.mxu0 %v107
    %132 = vmatprep.subr.bf16.mxu0 0
    %133 = vmatpush1.bf16.xpose.msra.mxu0 0
    %134 = vmatprep.subr.bf16.mxu0 0
    %135 = vmatpush1.bf16.xpose.msra.mxu0 0
    %136 = vmatprep.subr.bf16.mxu0 0
    %137 = vmatpush1.bf16.xpose.msra.mxu0 0
    %138 = vmatprep.subr.bf16.mxu0 0
    %139 = vmatpush1.bf16.xpose.msra.mxu0 0
    %140 = vmatprep.subr.bf16.mxu0 0
    %141 = vmatpush1.bf16.xpose.msra.mxu0 0
    %142 = vmatprep.subr.bf16.mxu0 0
    %143 = vmatpush1.bf16.xpose.msra.mxu0 0
    %144 = vmatprep.subr.bf16.mxu0 0
    %145 = vmatpush1.bf16.xpose.msra.mxu0 0
    %146 = vmatprep.subr.bf16.mxu0 0
    %147 = vmatpush1.bf16.xpose.msra.mxu0 0
    %148 = vmatprep.mubr.bf16.mxu0 0
    %149 = vmatmul.mubr.bf16.gmra.mrb[0].mxu0 %v66
    %v150 = vpop.f32.mrb[0].mxu0
    %v151 = vadd.f32 0.0, %v150
    %v152 = vpop.f32.mrb[0].mxu0
    %v153 = vpop.f32.mrb[0].mxu0
    %v154 = vadd.f32 0.0, %v153
    %v155 = vpop.f32.mrb[0].mxu0
    %156 = vdwg.mxu0
    %v157 = vadd.f32 %v42, %v151
    %v158 = vadd.f32 %v43, %v154
    %159 = vst [vmem:[%s3] sm:$0xff] %v157
    %160 = vst [vmem:[%s3 + $0x8] sm:$0xff] %v158
    // Predicated region
    $region22: #{_forward_prepared.1} parent=1 // pred_check
      _
    $region23: #{_forward_prepared.1} parent=1 // pred_check_branch
      %162 = sbr.rel (0) target = $region25
    $region24: #{_forward_prepared.1} parent=1 // pred_region
      _
    $region25: #{_forward_prepared.1} parent=1 // pred_fallthru
      _
    // Predicated region
    $region26: #{_forward_prepared.1} parent=1 // pred_check
      _
    $region27: #{_forward_prepared.1} parent=1 // pred_check_branch
      %164 = sbr.rel (0) target = $region29
    $region28: #{_forward_prepared.1} parent=1 // pred_region
      _
    $region29: #{_forward_prepared.1} parent=1 // pred_fallthru
      _
    %165 = vsyncpa [#allocation3], 1

</llo_original>
